<compile_context>
chip_gen: v7x
topology: tpu7x:2x2x1
jax: 0.10.0
libtpu: 0.0.40
codegen_flags: <defaults>
</compile_context>

<pallas_src>
import functools

import jax
import jax.numpy as jnp
from jax.experimental import pallas as pl
from jax.experimental.pallas import tpu as pltpu


def _c2s_kernel(x_ref, o_ref, *, ratio, c_sub, n_sub):
    """x_ref: (C_BLK, r*r, H, W)  ->  o_ref: (C_BLK*H, r*OW), with OW = W*r."""
    r = ratio
    _, _, in_h, in_w = x_ref.shape
    ow = in_w * r
    rows_sub = c_sub * in_h

    # One-hot lane-scatter matrices (only r of them -- rh is handled purely by a
    # contiguous lane offset in the store):  scatter[rw][w, w*r + rw] = 1
    lane = jax.lax.broadcasted_iota(jnp.int32, (in_w, ow), 1)
    src = jax.lax.broadcasted_iota(jnp.int32, (in_w, ow), 0)
    scatter = [(lane == src * r + rw).astype(x_ref.dtype) for rw in range(r)]

    def body(idx, carry):
        c0 = pl.multiple_of(idx * c_sub, c_sub)            # channel offset in block
        r0 = pl.multiple_of(idx * rows_sub, rows_sub)      # output row offset
        for rh in range(r):
            acc = None
            for rw in range(r):
                s = rh * r + rw
                # (c_sub, H, W) -> (c_sub*H, W): batch matmul M-dim over channels*rows.
                plane = x_ref[pl.ds(c0, c_sub), s, :, :].reshape(rows_sub, in_w)
                # Exact: one-hot scatter -> each output element is exactly one x*1.0.
                term = jnp.dot(plane, scatter[rw], preferred_element_type=jnp.float32)
                acc = term if acc is None else acc + term
            # rh selects a contiguous OW-wide lane range (lane-aligned when OW%128==0).
            o_ref[pl.ds(r0, rows_sub), pl.ds(rh * ow, ow)] = acc.astype(o_ref.dtype)
        return carry

    jax.lax.fori_loop(0, n_sub, body, 0, unroll=(n_sub <= 8))


def _divisors(n):
    return [d for d in range(1, n + 1) if n % d == 0]


def channel2spatial(x, ratio=2, *, target_block_bytes=4 << 20, acc_budget_elems=1 << 14):
    b, in_c, in_h, in_w = x.shape
    r = ratio
    assert in_c % (r * r) == 0, f"in_channel: {in_c}, ratio: {r}"
    oc = in_c // (r * r)
    oh, ow = in_h * r, in_w * r
    n_total = b * oc
    itemsize = jnp.dtype(x.dtype).itemsize
    group_bytes = r * r * in_h * in_w * itemsize          # bytes per (b, oc) group

    # --- Channel-chunk selection: ~target_block_bytes per buffer (fits double-buffered
    # well inside v7x's 64 MiB VMEM), keep >= 2 grid steps when possible (megacore),
    # and keep the output block's sublane extent a multiple of 8 (or the full array).
    cap = max(1, target_block_bytes // group_bytes)
    if n_total >= 2:
        cap = min(cap, max(1, n_total // 2))
    cands = [d for d in _divisors(n_total)
             if d <= cap and ((d * in_h) % 8 == 0 or d == n_total)]
    c_blk = max(cands) if cands else n_total

    # --- In-kernel sub-chunk: bound the f32 accumulator held in registers (~64 KiB).
    sub_cap = max(1, acc_budget_elems // (in_h * ow))
    c_sub = max(d for d in _divisors(c_blk) if d <= sub_cap)
    n_sub = c_blk // c_sub

    block_bytes = c_blk * group_bytes                     # per-step input == output bytes
    vmem_limit = int(min(48 << 20, max(32 << 20, 6 * block_bytes)))

    x5 = x.reshape(n_total, r * r, in_h, in_w)            # free (contiguous) reshape
    grid = (n_total // c_blk,)

    kernel = functools.partial(_c2s_kernel, ratio=r, c_sub=c_sub, n_sub=n_sub)
    out_flat = pl.pallas_call(
        kernel,
        out_shape=jax.ShapeDtypeStruct((n_total * in_h, r * ow), x.dtype),
        grid_spec=pltpu.PrefetchScalarGridSpec(
            num_scalar_prefetch=0,
            grid=grid,
            in_specs=[pl.BlockSpec((c_blk, r * r, in_h, in_w),
                                   lambda i: (i, 0, 0, 0))],
            out_specs=pl.BlockSpec((c_blk * in_h, r * ow), lambda i: (i, 0)),
        ),
        compiler_params=pltpu.CompilerParams(
            dimension_semantics=("parallel",),
            vmem_limit_bytes=vmem_limit),
        cost_estimate=pl.CostEstimate(
            flops=int(2 * (r * r) * n_total * in_h * in_w * ow),
            transcendentals=0,
            bytes_accessed=int(2 * x.size * itemsize)),
    )(x5)

    # Free (contiguous) reshape back to the NCHW pixel-shuffle layout.
    return out_flat.reshape(b, oc, oh, ow)


def _reference(x, r):
    # Pure-JAX transcription of the PyTorch forward (non-ONNX branch).
    b, c, h, w = x.shape
    oc = c // (r * r)
    y = jnp.transpose(x, (0, 2, 3, 1)).reshape(b, h, w, oc, r, r)
    y = jnp.transpose(y, (0, 3, 1, 4, 2, 5)).reshape(b, oc, h * r, w * r)
    return y


if __name__ == "__main__":
    key = jax.random.PRNGKey(0)
    b, in_c, in_h, in_w, ratio = 2, 16, 16, 16, 2           # out: (2, 4, 32, 32)
    x = jax.random.normal(key, (b, in_c, in_h, in_w), dtype=jnp.float32)

    out = channel2spatial(x, ratio=ratio)
    out = jax.block_until_ready(out)

    ref = _reference(x, ratio)
    assert out.shape == ref.shape, (out.shape, ref.shape)
    assert jnp.allclose(out, ref), "Pallas output mismatch vs reference pixel-shuffle"
    print("KERNEL_OK")
</pallas_src>

<mosaic_0001>
module attributes {stable_mosaic.version = 11 : i64} {
  func.func @_c2s_kernel(%arg0: i32, %arg1: memref<4x4x16x16xf32, #tpu.memory_space<vmem>>, %arg2: memref<64x64xf32, #tpu.memory_space<vmem>>) attributes {dimension_semantics = [#tpu.dimension_semantics<parallel>], iteration_bounds = array<i64: 2>, scalar_prefetch = 0 : i64, scratch_operands = 0 : i64, tpu.core_type = #tpu.core_type<tc>, window_params = [{transform_indices = @transform_0, window_bounds = array<i64: 4, 4, 16, 16>}, {transform_indices = @transform_1, window_bounds = array<i64: 64, 64>}]} {
    %0 = tpu.iota {dimensions = array<i32: 1>} : vector<16x32xi32>
    %1 = tpu.iota {dimensions = array<i32: 0>} : vector<16x32xi32>
    %c2_i32 = arith.constant 2 : i32
    %2 = vector.broadcast %c2_i32 : i32 to vector<16x32xi32>
    %3 = arith.muli %1, %2 : vector<16x32xi32>
    %c0_i32 = arith.constant 0 : i32
    %4 = vector.broadcast %c0_i32 : i32 to vector<16x32xi32>
    %5 = arith.addi %3, %4 : vector<16x32xi32>
    %6 = arith.cmpi eq, %0, %5 : vector<16x32xi32>
    %7 = arith.extui %6 : vector<16x32xi1> to vector<16x32xi32>
    %8 = arith.sitofp %7 : vector<16x32xi32> to vector<16x32xf32>
    %c2_i32_0 = arith.constant 2 : i32
    %9 = vector.broadcast %c2_i32_0 : i32 to vector<16x32xi32>
    %10 = arith.muli %1, %9 : vector<16x32xi32>
    %c1_i32 = arith.constant 1 : i32
    %11 = vector.broadcast %c1_i32 : i32 to vector<16x32xi32>
    %12 = arith.addi %10, %11 : vector<16x32xi32>
    %13 = arith.cmpi eq, %0, %12 : vector<16x32xi32>
    %14 = arith.extui %13 : vector<16x32xi1> to vector<16x32xi32>
    %15 = arith.sitofp %14 : vector<16x32xi32> to vector<16x32xf32>
    %c0_i32_1 = arith.constant 0 : i32
    %c4_i32 = arith.constant 4 : i32
    %16 = arith.muli %c0_i32_1, %c4_i32 : i32
    %17 = tpu.assume_multiple %16, 4 : i32
    %c64_i32 = arith.constant 64 : i32
    %18 = arith.muli %c0_i32_1, %c64_i32 : i32
    %19 = tpu.assume_multiple %18, 64 : i32
    %20 = arith.index_cast %17 : i32 to index
    %c0 = arith.constant 0 : index
    %c0_2 = arith.constant 0 : index
    %c0_3 = arith.constant 0 : index
    %21 = vector.load %arg1[%20, %c0, %c0_2, %c0_3] : memref<4x4x16x16xf32, #tpu.memory_space<vmem>>, vector<4x1x16x16xf32>
    %22 = vector.shape_cast %21 : vector<4x1x16x16xf32> to vector<4x16x16xf32>
    %23 = vector.shape_cast %22 : vector<4x16x16xf32> to vector<64x16xf32>
    %cst = arith.constant dense<0.000000e+00> : vector<64x32xf32>
    %24 = tpu.matmul %23, %8, %cst {dimension_numbers = #tpu.dot_dimension_numbers<[1], [0], [0], [1], [0, 0, 1, 1], [], []>} : vector<64x16xf32>, vector<16x32xf32>, vector<64x32xf32> -> vector<64x32xf32>
    %25 = arith.index_cast %17 : i32 to index
    %c1 = arith.constant 1 : index
    %c0_4 = arith.constant 0 : index
    %c0_5 = arith.constant 0 : index
    %26 = vector.load %arg1[%25, %c1, %c0_4, %c0_5] : memref<4x4x16x16xf32, #tpu.memory_space<vmem>>, vector<4x1x16x16xf32>
    %27 = vector.shape_cast %26 : vector<4x1x16x16xf32> to vector<4x16x16xf32>
    %28 = vector.shape_cast %27 : vector<4x16x16xf32> to vector<64x16xf32>
    %cst_6 = arith.constant dense<0.000000e+00> : vector<64x32xf32>
    %29 = tpu.matmul %28, %15, %cst_6 {dimension_numbers = #tpu.dot_dimension_numbers<[1], [0], [0], [1], [0, 0, 1, 1], [], []>} : vector<64x16xf32>, vector<16x32xf32>, vector<64x32xf32> -> vector<64x32xf32>
    %30 = arith.addf %24, %29 : vector<64x32xf32>
    %31 = arith.index_cast %19 : i32 to index
    %c0_7 = arith.constant 0 : index
    %32 = vector.load %arg2[%31, %c0_7] : memref<64x64xf32, #tpu.memory_space<vmem>>, vector<64x32xf32>
    tpu.vector_store %arg2[%31, %c0_7], %30 {strides = array<i32>} : memref<64x64xf32, #tpu.memory_space<vmem>>, vector<64x32xf32>,
    %33 = arith.index_cast %17 : i32 to index
    %c2 = arith.constant 2 : index
    %c0_8 = arith.constant 0 : index
    %c0_9 = arith.constant 0 : index
    %34 = vector.load %arg1[%33, %c2, %c0_8, %c0_9] : memref<4x4x16x16xf32, #tpu.memory_space<vmem>>, vector<4x1x16x16xf32>
    %35 = vector.shape_cast %34 : vector<4x1x16x16xf32> to vector<4x16x16xf32>
    %36 = vector.shape_cast %35 : vector<4x16x16xf32> to vector<64x16xf32>
    %cst_10 = arith.constant dense<0.000000e+00> : vector<64x32xf32>
    %37 = tpu.matmul %36, %8, %cst_10 {dimension_numbers = #tpu.dot_dimension_numbers<[1], [0], [0], [1], [0, 0, 1, 1], [], []>} : vector<64x16xf32>, vector<16x32xf32>, vector<64x32xf32> -> vector<64x32xf32>
    %38 = arith.index_cast %17 : i32 to index
    %c3 = arith.constant 3 : index
    %c0_11 = arith.constant 0 : index
    %c0_12 = arith.constant 0 : index
    %39 = vector.load %arg1[%38, %c3, %c0_11, %c0_12] : memref<4x4x16x16xf32, #tpu.memory_space<vmem>>, vector<4x1x16x16xf32>
    %40 = vector.shape_cast %39 : vector<4x1x16x16xf32> to vector<4x16x16xf32>
    %41 = vector.shape_cast %40 : vector<4x16x16xf32> to vector<64x16xf32>
    %cst_13 = arith.constant dense<0.000000e+00> : vector<64x32xf32>
    %42 = tpu.matmul %41, %15, %cst_13 {dimension_numbers = #tpu.dot_dimension_numbers<[1], [0], [0], [1], [0, 0, 1, 1], [], []>} : vector<64x16xf32>, vector<16x32xf32>, vector<64x32xf32> -> vector<64x32xf32>
    %43 = arith.addf %37, %42 : vector<64x32xf32>
    %44 = arith.index_cast %19 : i32 to index
    %c32 = arith.constant 32 : index
    %45 = vector.load %arg2[%44, %c32] : memref<64x64xf32, #tpu.memory_space<vmem>>, vector<64x32xf32>
    tpu.vector_store %arg2[%44, %c32], %43 {strides = array<i32>} : memref<64x64xf32, #tpu.memory_space<vmem>>, vector<64x32xf32>,
    %c1_i32_14 = arith.constant 1 : i32
    return
  }
  func.func @transform_0(%arg0: i32) -> (i32, i32, i32, i32) {
    %c0_i32 = arith.constant 0 : i32
    %c0_i32_0 = arith.constant 0 : i32
    %c0_i32_1 = arith.constant 0 : i32
    %c0_i32_2 = arith.constant 0 : i32
    return %arg0, %c0_i32, %c0_i32_0, %c0_i32_1 : i32, i32, i32, i32
  }
  func.func @transform_1(%arg0: i32) -> (i32, i32) {
    %c0_i32 = arith.constant 0 : i32
    %c0_i32_0 = arith.constant 0 : i32
    return %arg0, %c0_i32 : i32, i32
  }
}

</mosaic_0001>

<llo_original>
// kernel: tpu_custom_call.1
$region0: #{tpu_custom_call.1}
  #allocation0 [shape = 'u32[]', space=smem, size = 0x4, offset = 0x4, fixed_abs, tag = 'smem constant byte address 0x4 - core index']
  #allocation1 [shape = 'u32[144,128]{1,0:T(1,128)}', space=vmem, size = 0x12000, scoped, tag = 'internal scratch']
  %s0 = inlined_call_operand.hbm [shape: f32[8,4,16,16], index: 0, kind: input, shape index: {}]
  %s1 = inlined_call_operand.vmem [shape: f32[128,64], index: 1, kind: output, shape index: {}]
  %s2 = sld [smem:[#allocation0]]
  $region41: #{tpu_custom_call.1} parent=0
    _
  %s4 = ssub.s32 1, %s2
  %s5 = scalar_select 0, %s4, %s2
  $region1: #{tpu_custom_call.1} parent=0
    #allocation2 [shape = 'u8[262144]{0}', space=vmem, size = 0x40000, scoped, tag = 'input window, operand 0']
    #allocation3 [shape = 's32[2]{0}', space=sflag, size = 0x8, scoped, tag = 'scoped memory for tpu_custom_call.1']
    %6 = vsyncpa [#allocation3], 0
    %s7 = scalar_lea.sflag [#allocation3], 1
    %8 = vsyncpa %s7, 0
    loop: start=0, step=1, limit=4
    $region2: #{tpu_custom_call.1} parent=1 // loop_pre_header
      _
    $region3: #{tpu_custom_call.1} parent=1 // loop_header
      %s10 = sphi 0, %s14
      %p11 = scmp.ge.s32.totalorder %s10, 4
      %s20 = sphi 0, %s22
      %s23 = sphi 0, %s20
      %s24 = sphi 0, %s23
      %s40 = sphi 0, %s24
      %s46 = sphi 0, %s48
      %s49 = sphi 0, %s46
      %s50 = sphi 0, %s49
      %s66 = sphi 0, %s50
    $region4: #{tpu_custom_call.1} parent=1 // loop_header_branch
      %13 = sbr.rel (%p11) target = $region8
    $region5: #{tpu_custom_call.1} parent=1 // loop_body
      %s15 = ssub.s32 %s10, 1
      %s16 = ssub.s32 %s10, 2
      %s17 = sadd.s32 %s10, 1
      %s18 = ssub.s32 %s10, %s17
      %p19 = scmp.eq.s32.totalorder %s18, 0
      %s21 = sadd.s32 %s20, 1
      %s22 = scalar_select %p19, %s20, %s21
      %p25 = pneg %p19
      %p26 = scmp.eq.s32.totalorder %s10, 1
      %p27 = por %p25, %p26
      %p28 = scmp.ne.s32.totalorder %s20, %s23
      %p29 = scmp.eq.s32.totalorder %s10, 0
      %p30 = por %p28, %p29
      %p31 = scmp.ne.s32.totalorder %s20, %s23
      %p32 = scmp.eq.s32.totalorder %s15, 1
      %p33 = por %p31, %p32
      %p34 = scmp.ne.s32.totalorder %s23, %s24
      %p35 = scmp.eq.s32.totalorder %s15, 0
      %p36 = por %p34, %p35
      %p37 = scmp.ne.s32.totalorder %s23, %s24
      %p38 = scmp.eq.s32.totalorder %s16, 1
      %p39 = por %p37, %p38
      %p41 = scmp.ne.s32.totalorder %s24, %s40
      %p42 = scmp.eq.s32.totalorder %s16, 0
      %p43 = por %p41, %p42
      %s44 = ssub.s32 %s10, %s17
      %p45 = scmp.eq.s32.totalorder %s44, 0
      %s47 = sadd.s32 %s46, 1
      %s48 = scalar_select %p45, %s46, %s47
      %p51 = pneg %p45
      %p52 = scmp.eq.s32.totalorder %s10, 1
      %p53 = por %p51, %p52
      %p54 = scmp.ne.s32.totalorder %s46, %s49
      %p55 = scmp.eq.s32.totalorder %s10, 0
      %p56 = por %p54, %p55
      %p57 = scmp.ne.s32.totalorder %s46, %s49
      %p58 = scmp.eq.s32.totalorder %s15, 1
      %p59 = por %p57, %p58
      %p60 = scmp.ne.s32.totalorder %s49, %s50
      %p61 = scmp.eq.s32.totalorder %s15, 0
      %p62 = por %p60, %p61
      %p63 = scmp.ne.s32.totalorder %s49, %s50
      %p64 = scmp.eq.s32.totalorder %s16, 1
      %p65 = por %p63, %p64
      %p67 = scmp.ne.s32.totalorder %s50, %s66
      %p68 = scmp.eq.s32.totalorder %s16, 0
      %p69 = por %p67, %p68
      %p70 = scmp.le.s32.totalorder 1, %s10
      %p71 = scmp.lt.s32.totalorder %s10, 3
      %p72 = pnand %p70, %p71
      %p73 = pneg %p72
      // Predicated region
      $region9: #{tpu_custom_call.1} parent=5 // pred_check
        _
      $region10: #{tpu_custom_call.1} parent=5 // pred_check_branch
        %75 = sbr.rel (%p72) target = $region12
      $region11: #{tpu_custom_call.1} parent=5 // pred_region
        %s76 = ssub.s32 %s10, 1
      $region12: #{tpu_custom_call.1} parent=5 // pred_fallthru
        _
      %p77 = scmp.lt.s32.totalorder %s10, 2
      // Predicated region
      $region13: #{tpu_custom_call.1} parent=5 // pred_check
        %p78 = pneg %p77
      $region14: #{tpu_custom_call.1} parent=5 // pred_check_branch
        %80 = sbr.rel (%p78) target = $region16
      $region15: #{tpu_custom_call.1} parent=5 // pred_region
        // Predicated region
        $region17: #{tpu_custom_call.1} parent=15 // pred_check
          %p81 = pneg %p30
        $region18: #{tpu_custom_call.1} parent=15 // pred_check_branch
          %83 = sbr.rel (%p81) target = $region20
        $region19: #{tpu_custom_call.1} parent=15 // pred_region
          %s84 = sand.u32 %s20, 1
          %s85 = scalar_lea.sflag [#allocation3], %s84
          %s86 = sand.u32 %s20, 1
          %s87 = smul.addr %s86, 256
          %s88 = scalar_lea.vmem [#allocation2], %s87
          %s89 = smul.u32 4, %s10
          %s91 = ssub.s32 4096, 4096
          %92 = vsyncadd %s85, %s91
          %s93 = smul.addr %s89, 8
          %s94 = smul.addr %s93, 128
          %s95 = scalar_lea.hbm %s0, %s94
          %s96 = sshll.u32 %s88, 4
          %s97 = int_to_ptr.vmem [resolvable:$true] %s96
          %102 = dma.hbm_to_vmem [thread:$0]  %s95, 4096, %s97, %s85, 128, 128, 8
        $region20: #{tpu_custom_call.1} parent=15 // pred_fallthru
          _
      $region16: #{tpu_custom_call.1} parent=5 // pred_fallthru
        _
      %p103 = scmp.le.s32.totalorder 1, %s10
      %p104 = scmp.lt.s32.totalorder %s10, 3
      %p105 = pnand %p103, %p104
      %p106 = pneg %p105
      // Predicated region
      $region21: #{tpu_custom_call.1} parent=5 // pred_check
        _
      $region22: #{tpu_custom_call.1} parent=5 // pred_check_branch
        %108 = sbr.rel (%p105) target = $region24
      $region23: #{tpu_custom_call.1} parent=5 // pred_region
        %s109 = ssub.s32 %s10, 1
        %s110 = sand.u32 %s23, 1
        %s111 = scalar_lea.sflag [#allocation3], %s110
        %s112 = sand.u32 %s23, 1
        %s113 = smul.addr %s112, 256
        %s114 = scalar_lea.vmem [#allocation2], %s113
        // Predicated region
        $region25: #{tpu_custom_call.1} parent=23 // pred_check
          %p115 = pneg %p36
        $region26: #{tpu_custom_call.1} parent=23 // pred_check_branch
          %117 = sbr.rel (%p115) target = $region28
        $region27: #{tpu_custom_call.1} parent=23 // pred_region
          %118 = dma.done %s111, 4096
        $region28: #{tpu_custom_call.1} parent=23 // pred_fallthru
          _
        %s119 = sand.u32 %s23, 1
        %s120 = scalar_lea.sflag [#allocation3], %s119
        %s121 = sand.u32 %s23, 1
        %s122 = smul.addr %s121, 256
        %s123 = scalar_lea.vmem [#allocation2], %s122
        %p124 = pneg %p36
        %p125 = pneg %p33
        %p126 = pneg %p62
        %p127 = pneg %p59
        %s128 = smul.u32 8, %s15
        %p129 = scmp.lt.s32.totalorder %s128, 15
        %s130 = scalar_select %p129, %s128, 15
        %s131 = smul.addr %s130, 8
        %s132 = scalar_lea.vmem %s1, %s131
        %s133 = smul.u32 4, %s15
        %s134 = smul.u32 8, %s15
        %p135 = scmp.lt.s32.totalorder %s134, 15
        %s136 = scalar_select %p135, %s134, 15
        %s137 = smul.addr %s136, 8
        %s138 = scalar_lea.vmem %s1, %s137
        %s139 = smul.u32 8, %s15
        %v140 = vlaneseq
        %v141 = vand.u32 %v140, 127
        %v142 = vlaneseq
        %v143 = vshrl.u32 %v142, 7
        %v144 = vadd.s32 %v143, 8
        %v145 = vmul.u32 %v143, 2
        %v146 = vmul.u32 %v144, 2
        %vm147 = vcmp.eq.s32.totalorder %v141, %v145
        %vm148 = vcmp.eq.s32.totalorder %v141, %v146
        %v149 = vsel %vm147, 1, 0
        %v150 = vsel %vm148, 1, 0
        %v151 = vcvt.s32.f32 %v149
        %v152 = vcvt.s32.f32 %v150
        %v153 = vadd.s32 %v145, 1
        %v154 = vadd.s32 %v146, 1
        %vm155 = vcmp.eq.s32.totalorder %v141, %v153
        %vm156 = vcmp.eq.s32.totalorder %v141, %v154
        %v157 = vsel %vm155, 1, 0
        %v158 = vsel %vm156, 1, 0
        %v159 = vcvt.s32.f32 %v157
        %v160 = vcvt.s32.f32 %v158
        %s161 = smul.u32 0, 64
        %s162 = scalar_lea.vmem %s114, %s161 [#allocation2]
        %v163 = vld [vmem:[%s162] sm:$0xff]
        %v164 = vld [vmem:[%s162 + $0x8] sm:$0xff]
        %v165 = vld [vmem:[%s162 + $0x40] sm:$0xff]
        %v166 = vld [vmem:[%s162 + $0x48] sm:$0xff]
        %v167 = vld [vmem:[%s162 + $0x80] sm:$0xff]
        %v168 = vld [vmem:[%s162 + $0x88] sm:$0xff]
        %v169 = vld [vmem:[%s162 + $0xc0] sm:$0xff]
        %v170 = vld [vmem:[%s162 + $0xc8] sm:$0xff]
        %s171 = sadd.s32 16, %s161
        %s172 = scalar_lea.vmem %s114, %s171 [#allocation2]
        %v173 = vld [vmem:[%s172] sm:$0xff]
        %v174 = vld [vmem:[%s172 + $0x8] sm:$0xff]
        %v175 = vld [vmem:[%s172 + $0x40] sm:$0xff]
        %v176 = vld [vmem:[%s172 + $0x48] sm:$0xff]
        %v177 = vld [vmem:[%s172 + $0x80] sm:$0xff]
        %v178 = vld [vmem:[%s172 + $0x88] sm:$0xff]
        %v179 = vld [vmem:[%s172 + $0xc0] sm:$0xff]
        %v180 = vld [vmem:[%s172 + $0xc8] sm:$0xff]
        %vm181 = vcmask 130048
        %v183 = vsel %vm181, %v173, 0
        %v186 = vsel %vm181, %v174, 0
        %v189 = vsel %vm181, %v175, 0
        %v192 = vsel %vm181, %v176, 0
        %v195 = vsel %vm181, %v177, 0
        %v198 = vsel %vm181, %v178, 0
        %v201 = vsel %vm181, %v179, 0
        %v204 = vsel %vm181, %v180, 0
        %206 = vmatprep.subr.mxu0 0.0
        %207 = vmatpush1.msra.mxu0 %v159
        %208 = vmatprep.subr.mxu0 0.0
        %209 = vmatpush1.msra.mxu0 %v160
        %210 = vmatprep.subr.mxu0 0.0
        %211 = vmatpush1.msra.mxu0 0.0
        %212 = vmatprep.subr.mxu0 0.0
        %213 = vmatpush1.msra.mxu0 0.0
        %214 = vmatprep.subr.mxu0 0.0
        %215 = vmatpush1.msra.mxu0 0.0
        %216 = vmatprep.subr.mxu0 0.0
        %217 = vmatpush1.msra.mxu0 0.0
        %218 = vmatprep.subr.mxu0 0.0
        %219 = vmatpush1.msra.mxu0 0.0
        %220 = vmatprep.subr.mxu0 0.0
        %221 = vmatpush1.msra.mxu0 0.0
        %222 = vmatprep.subr.mxu0 0.0
        %223 = vmatpush1.msra.mxu0 0.0
        %224 = vmatprep.subr.mxu0 0.0
        %225 = vmatpush1.msra.mxu0 0.0
        %226 = vmatprep.subr.mxu0 0.0
        %227 = vmatpush1.msra.mxu0 0.0
        %228 = vmatprep.subr.mxu0 0.0
        %229 = vmatpush1.msra.mxu0 0.0
        %230 = vmatprep.subr.mxu0 0.0
        %231 = vmatpush1.msra.mxu0 0.0
        %232 = vmatprep.subr.mxu0 0.0
        %233 = vmatpush1.msra.mxu0 0.0
        %234 = vmatprep.subr.mxu0 0.0
        %235 = vmatpush1.msra.mxu0 0.0
        %236 = vmatprep.subr.mxu0 0.0
        %237 = vmatpush1.msra.mxu0 0.0
        %238 = vmatprep.subr.mxu0 0.0
        %239 = vmatpush1.msra.mxu0 0.0
        %240 = vmatprep.subr.mxu0 0.0
        %241 = vmatpush1.msra.mxu0 0.0
        %242 = vmatprep.subr.mxu0 0.0
        %243 = vmatpush1.msra.mxu0 0.0
        %244 = vmatprep.subr.mxu0 0.0
        %245 = vmatpush1.msra.mxu0 0.0
        %246 = vmatprep.subr.mxu0 0.0
        %247 = vmatpush1.msra.mxu0 0.0
        %248 = vmatprep.subr.mxu0 0.0
        %249 = vmatpush1.msra.mxu0 0.0
        %250 = vmatprep.subr.mxu0 0.0
        %251 = vmatpush1.msra.mxu0 0.0
        %252 = vmatprep.subr.mxu0 0.0
        %253 = vmatpush1.msra.mxu0 0.0
        %254 = vmatprep.subr.mxu0 0.0
        %255 = vmatpush1.msra.mxu0 0.0
        %256 = vmatprep.subr.mxu0 0.0
        %257 = vmatpush1.msra.mxu0 0.0
        %258 = vmatprep.subr.mxu0 0.0
        %259 = vmatpush1.msra.mxu0 0.0
        %260 = vmatprep.subr.mxu0 0.0
        %261 = vmatpush1.msra.mxu0 0.0
        %262 = vmatprep.subr.mxu0 0.0
        %263 = vmatpush1.msra.mxu0 0.0
        %264 = vmatprep.subr.mxu0 0.0
        %265 = vmatpush1.msra.mxu0 0.0
        %266 = vmatprep.subr.mxu0 0.0
        %267 = vmatpush1.msra.mxu0 0.0
        %268 = vmatprep.subr.mxu0 0.0
        %269 = vmatpush1.msra.mxu0 0.0
        %270 = vmatprep.mubr.f32.mxu0 0.0
        %271 = vmatmul.mubr.f32.gmra.mrb[0].mxu0 %v183
        %v272 = vpop.f32.mrb[0].mxu0
        %v273 = vadd.f32 0.0, %v272
        %v274 = vpop.f32.mrb[0].mxu0
        %275 = vmatprep.mubr.f32.mxu0 0.0
        %276 = vmatmul.mubr.f32.gmra.mrb[0].mxu0 %v186
        %v277 = vpop.f32.mrb[0].mxu0
        %v278 = vadd.f32 0.0, %v277
        %v279 = vpop.f32.mrb[0].mxu0
        %280 = vmatprep.mubr.f32.mxu0 0.0
        %281 = vmatmul.mubr.f32.gmra.mrb[0].mxu0 %v189
        %v282 = vpop.f32.mrb[0].mxu0
        %v283 = vadd.f32 0.0, %v282
        %v284 = vpop.f32.mrb[0].mxu0
        %285 = vmatprep.mubr.f32.mxu0 0.0
        %286 = vmatmul.mubr.f32.gmra.mrb[0].mxu0 %v192
        %v287 = vpop.f32.mrb[0].mxu0
        %v288 = vadd.f32 0.0, %v287
        %v289 = vpop.f32.mrb[0].mxu0
        %290 = vmatprep.mubr.f32.mxu0 0.0
        %291 = vmatmul.mubr.f32.gmra.mrb[0].mxu0 %v195
        %v292 = vpop.f32.mrb[0].mxu0
        %v293 = vadd.f32 0.0, %v292
        %v294 = vpop.f32.mrb[0].mxu0
        %295 = vmatprep.mubr.f32.mxu0 0.0
        %296 = vmatmul.mubr.f32.gmra.mrb[0].mxu0 %v198
        %v297 = vpop.f32.mrb[0].mxu0
        %v298 = vadd.f32 0.0, %v297
        %v299 = vpop.f32.mrb[0].mxu0
        %300 = vmatprep.mubr.f32.mxu0 0.0
        %301 = vmatmul.mubr.f32.gmra.mrb[0].mxu0 %v201
        %v302 = vpop.f32.mrb[0].mxu0
        %v303 = vadd.f32 0.0, %v302
        %v304 = vpop.f32.mrb[0].mxu0
        %305 = vmatprep.mubr.f32.mxu0 0.0
        %306 = vmatmul.mubr.f32.gmra.mrb[0].mxu0 %v204
        %v307 = vpop.f32.mrb[0].mxu0
        %v308 = vadd.f32 0.0, %v307
        %v309 = vpop.f32.mrb[0].mxu0
        %310 = vdwg.mxu0
        %v312 = vsel %vm181, %v163, 0
        %v315 = vsel %vm181, %v164, 0
        %v318 = vsel %vm181, %v165, 0
        %v321 = vsel %vm181, %v166, 0
        %v324 = vsel %vm181, %v167, 0
        %v327 = vsel %vm181, %v168, 0
        %v330 = vsel %vm181, %v169, 0
        %v333 = vsel %vm181, %v170, 0
        %335 = vmatprep.subr.mxu0 0.0
        %336 = vmatpush1.msra.mxu0 %v151
        %337 = vmatprep.subr.mxu0 0.0
        %338 = vmatpush1.msra.mxu0 %v152
        %339 = vmatprep.subr.mxu0 0.0
        %340 = vmatpush1.msra.mxu0 0.0
        %341 = vmatprep.subr.mxu0 0.0
        %342 = vmatpush1.msra.mxu0 0.0
        %343 = vmatprep.subr.mxu0 0.0
        %344 = vmatpush1.msra.mxu0 0.0
        %345 = vmatprep.subr.mxu0 0.0
        %346 = vmatpush1.msra.mxu0 0.0
        %347 = vmatprep.subr.mxu0 0.0
        %348 = vmatpush1.msra.mxu0 0.0
        %349 = vmatprep.subr.mxu0 0.0
        %350 = vmatpush1.msra.mxu0 0.0
        %351 = vmatprep.subr.mxu0 0.0
        %352 = vmatpush1.msra.mxu0 0.0
        %353 = vmatprep.subr.mxu0 0.0
        %354 = vmatpush1.msra.mxu0 0.0
        %355 = vmatprep.subr.mxu0 0.0
        %356 = vmatpush1.msra.mxu0 0.0
        %357 = vmatprep.subr.mxu0 0.0
        %358 = vmatpush1.msra.mxu0 0.0
        %359 = vmatprep.subr.mxu0 0.0
        %360 = vmatpush1.msra.mxu0 0.0
        %361 = vmatprep.subr.mxu0 0.0
        %362 = vmatpush1.msra.mxu0 0.0
        %363 = vmatprep.subr.mxu0 0.0
        %364 = vmatpush1.msra.mxu0 0.0
        %365 = vmatprep.subr.mxu0 0.0
        %366 = vmatpush1.msra.mxu0 0.0
        %367 = vmatprep.subr.mxu0 0.0
        %368 = vmatpush1.msra.mxu0 0.0
        %369 = vmatprep.subr.mxu0 0.0
        %370 = vmatpush1.msra.mxu0 0.0
        %371 = vmatprep.subr.mxu0 0.0
        %372 = vmatpush1.msra.mxu0 0.0
        %373 = vmatprep.subr.mxu0 0.0
        %374 = vmatpush1.msra.mxu0 0.0
        %375 = vmatprep.subr.mxu0 0.0
        %376 = vmatpush1.msra.mxu0 0.0
        %377 = vmatprep.subr.mxu0 0.0
        %378 = vmatpush1.msra.mxu0 0.0
        %379 = vmatprep.subr.mxu0 0.0
        %380 = vmatpush1.msra.mxu0 0.0
        %381 = vmatprep.subr.mxu0 0.0
        %382 = vmatpush1.msra.mxu0 0.0
        %383 = vmatprep.subr.mxu0 0.0
        %384 = vmatpush1.msra.mxu0 0.0
        %385 = vmatprep.subr.mxu0 0.0
        %386 = vmatpush1.msra.mxu0 0.0
        %387 = vmatprep.subr.mxu0 0.0
        %388 = vmatpush1.msra.mxu0 0.0
        %389 = vmatprep.subr.mxu0 0.0
        %390 = vmatpush1.msra.mxu0 0.0
        %391 = vmatprep.subr.mxu0 0.0
        %392 = vmatpush1.msra.mxu0 0.0
        %393 = vmatprep.subr.mxu0 0.0
        %394 = vmatpush1.msra.mxu0 0.0
        %395 = vmatprep.subr.mxu0 0.0
        %396 = vmatpush1.msra.mxu0 0.0
        %397 = vmatprep.subr.mxu0 0.0
        %398 = vmatpush1.msra.mxu0 0.0
        %399 = vmatprep.mubr.f32.mxu0 0.0
        %400 = vmatmul.mubr.f32.gmra.mrb[0].mxu0 %v312
        %v401 = vpop.f32.mrb[0].mxu0
        %v402 = vadd.f32 %v273, %v401
        %v403 = vpop.f32.mrb[0].mxu0
        %404 = vmatprep.mubr.f32.mxu0 0.0
        %405 = vmatmul.mubr.f32.gmra.mrb[0].mxu0 %v315
        %v406 = vpop.f32.mrb[0].mxu0
        %v407 = vadd.f32 %v278, %v406
        %v408 = vpop.f32.mrb[0].mxu0
        %409 = vmatprep.mubr.f32.mxu0 0.0
        %410 = vmatmul.mubr.f32.gmra.mrb[0].mxu0 %v318
        %v411 = vpop.f32.mrb[0].mxu0
        %v412 = vadd.f32 %v283, %v411
        %v413 = vpop.f32.mrb[0].mxu0
        %414 = vmatprep.mubr.f32.mxu0 0.0
        %415 = vmatmul.mubr.f32.gmra.mrb[0].mxu0 %v321
        %v416 = vpop.f32.mrb[0].mxu0
        %v417 = vadd.f32 %v288, %v416
        %v418 = vpop.f32.mrb[0].mxu0
        %419 = vmatprep.mubr.f32.mxu0 0.0
        %420 = vmatmul.mubr.f32.gmra.mrb[0].mxu0 %v324
        %v421 = vpop.f32.mrb[0].mxu0
        %v422 = vadd.f32 %v293, %v421
        %v423 = vpop.f32.mrb[0].mxu0
        %424 = vmatprep.mubr.f32.mxu0 0.0
        %425 = vmatmul.mubr.f32.gmra.mrb[0].mxu0 %v327
        %v426 = vpop.f32.mrb[0].mxu0
        %v427 = vadd.f32 %v298, %v426
        %v428 = vpop.f32.mrb[0].mxu0
        %429 = vmatprep.mubr.f32.mxu0 0.0
        %430 = vmatmul.mubr.f32.gmra.mrb[0].mxu0 %v330
        %v431 = vpop.f32.mrb[0].mxu0
        %v432 = vadd.f32 %v303, %v431
        %v433 = vpop.f32.mrb[0].mxu0
        %434 = vmatprep.mubr.f32.mxu0 0.0
        %435 = vmatmul.mubr.f32.gmra.mrb[0].mxu0 %v333
        %v436 = vpop.f32.mrb[0].mxu0
        %v437 = vadd.f32 %v308, %v436
        %v438 = vpop.f32.mrb[0].mxu0
        %439 = vdwg.mxu0
        %vm440 = vcmask 261120
        %441 = vst.msk [vmem:[%s138] sm:$0xff] %vm440, %v402
        %442 = vst.msk [vmem:[%s138 + $0x8] sm:$0xff] %vm440, %v407
        %443 = vst.msk [vmem:[%s138 + $0x10] sm:$0xff] %vm440, %v412
        %444 = vst.msk [vmem:[%s138 + $0x18] sm:$0xff] %vm440, %v417
        %445 = vst.msk [vmem:[%s138 + $0x20] sm:$0xff] %vm440, %v422
        %446 = vst.msk [vmem:[%s138 + $0x28] sm:$0xff] %vm440, %v427
        %447 = vst.msk [vmem:[%s138 + $0x30] sm:$0xff] %vm440, %v432
        %448 = vst.msk [vmem:[%s138 + $0x38] sm:$0xff] %vm440, %v437
        %s449 = sadd.s32 32, %s161
        %s450 = scalar_lea.vmem %s114, %s449 [#allocation2]
        %v451 = vld [vmem:[%s450] sm:$0xff]
        %v452 = vld [vmem:[%s450 + $0x8] sm:$0xff]
        %v453 = vld [vmem:[%s450 + $0x40] sm:$0xff]
        %v454 = vld [vmem:[%s450 + $0x48] sm:$0xff]
        %v455 = vld [vmem:[%s450 + $0x80] sm:$0xff]
        %v456 = vld [vmem:[%s450 + $0x88] sm:$0xff]
        %v457 = vld [vmem:[%s450 + $0xc0] sm:$0xff]
        %v458 = vld [vmem:[%s450 + $0xc8] sm:$0xff]
        %s459 = sadd.s32 48, %s161
        %s460 = scalar_lea.vmem %s114, %s459 [#allocation2]
        %v461 = vld [vmem:[%s460] sm:$0xff]
        %v462 = vld [vmem:[%s460 + $0x8] sm:$0xff]
        %v463 = vld [vmem:[%s460 + $0x40] sm:$0xff]
        %v464 = vld [vmem:[%s460 + $0x48] sm:$0xff]
        %v465 = vld [vmem:[%s460 + $0x80] sm:$0xff]
        %v466 = vld [vmem:[%s460 + $0x88] sm:$0xff]
        %v467 = vld [vmem:[%s460 + $0xc0] sm:$0xff]
        %v468 = vld [vmem:[%s460 + $0xc8] sm:$0xff]
        %v470 = vsel %vm181, %v461, 0
        %v473 = vsel %vm181, %v462, 0
        %v476 = vsel %vm181, %v463, 0
        %v479 = vsel %vm181, %v464, 0
        %v482 = vsel %vm181, %v465, 0
        %v485 = vsel %vm181, %v466, 0
        %v488 = vsel %vm181, %v467, 0
        %v491 = vsel %vm181, %v468, 0
        %493 = vmatprep.subr.mxu0 0.0
        %494 = vmatpush1.msra.mxu0 %v159
        %495 = vmatprep.subr.mxu0 0.0
        %496 = vmatpush1.msra.mxu0 %v160
        %497 = vmatprep.subr.mxu0 0.0
        %498 = vmatpush1.msra.mxu0 0.0
        %499 = vmatprep.subr.mxu0 0.0
        %500 = vmatpush1.msra.mxu0 0.0
        %501 = vmatprep.subr.mxu0 0.0
        %502 = vmatpush1.msra.mxu0 0.0
        %503 = vmatprep.subr.mxu0 0.0
        %504 = vmatpush1.msra.mxu0 0.0
        %505 = vmatprep.subr.mxu0 0.0
        %506 = vmatpush1.msra.mxu0 0.0
        %507 = vmatprep.subr.mxu0 0.0
        %508 = vmatpush1.msra.mxu0 0.0
        %509 = vmatprep.subr.mxu0 0.0
        %510 = vmatpush1.msra.mxu0 0.0
        %511 = vmatprep.subr.mxu0 0.0
        %512 = vmatpush1.msra.mxu0 0.0
        %513 = vmatprep.subr.mxu0 0.0
        %514 = vmatpush1.msra.mxu0 0.0
        %515 = vmatprep.subr.mxu0 0.0
        %516 = vmatpush1.msra.mxu0 0.0
        %517 = vmatprep.subr.mxu0 0.0
        %518 = vmatpush1.msra.mxu0 0.0
        %519 = vmatprep.subr.mxu0 0.0
        %520 = vmatpush1.msra.mxu0 0.0
        %521 = vmatprep.subr.mxu0 0.0
        %522 = vmatpush1.msra.mxu0 0.0
        %523 = vmatprep.subr.mxu0 0.0
        %524 = vmatpush1.msra.mxu0 0.0
        %525 = vmatprep.subr.mxu0 0.0
        %526 = vmatpush1.msra.mxu0 0.0
        %527 = vmatprep.subr.mxu0 0.0
        %528 = vmatpush1.msra.mxu0 0.0
        %529 = vmatprep.subr.mxu0 0.0
        %530 = vmatpush1.msra.mxu0 0.0
        %531 = vmatprep.subr.mxu0 0.0
        %532 = vmatpush1.msra.mxu0 0.0
        %533 = vmatprep.subr.mxu0 0.0
        %534 = vmatpush1.msra.mxu0 0.0
        %535 = vmatprep.subr.mxu0 0.0
        %536 = vmatpush1.msra.mxu0 0.0
        %537 = vmatprep.subr.mxu0 0.0
        %538 = vmatpush1.msra.mxu0 0.0
        %539 = vmatprep.subr.mxu0 0.0
        %540 = vmatpush1.msra.mxu0 0.0
        %541 = vmatprep.subr.mxu0 0.0
        %542 = vmatpush1.msra.mxu0 0.0
        %543 = vmatprep.subr.mxu0 0.0
        %544 = vmatpush1.msra.mxu0 0.0
        %545 = vmatprep.subr.mxu0 0.0
        %546 = vmatpush1.msra.mxu0 0.0
        %547 = vmatprep.subr.mxu0 0.0
        %548 = vmatpush1.msra.mxu0 0.0
        %549 = vmatprep.subr.mxu0 0.0
        %550 = vmatpush1.msra.mxu0 0.0
        %551 = vmatprep.subr.mxu0 0.0
        %552 = vmatpush1.msra.mxu0 0.0
        %553 = vmatprep.subr.mxu0 0.0
        %554 = vmatpush1.msra.mxu0 0.0
        %555 = vmatprep.subr.mxu0 0.0
        %556 = vmatpush1.msra.mxu0 0.0
        %557 = vmatprep.mubr.f32.mxu0 0.0
        %558 = vmatmul.mubr.f32.gmra.mrb[0].mxu0 %v470
        %v559 = vpop.f32.mrb[0].mxu0
        %v560 = vadd.f32 0.0, %v559
        %v561 = vpop.f32.mrb[0].mxu0
        %562 = vmatprep.mubr.f32.mxu0 0.0
        %563 = vmatmul.mubr.f32.gmra.mrb[0].mxu0 %v473
        %v564 = vpop.f32.mrb[0].mxu0
        %v565 = vadd.f32 0.0, %v564
        %v566 = vpop.f32.mrb[0].mxu0
        %567 = vmatprep.mubr.f32.mxu0 0.0
        %568 = vmatmul.mubr.f32.gmra.mrb[0].mxu0 %v476
        %v569 = vpop.f32.mrb[0].mxu0
        %v570 = vadd.f32 0.0, %v569
        %v571 = vpop.f32.mrb[0].mxu0
        %572 = vmatprep.mubr.f32.mxu0 0.0
        %573 = vmatmul.mubr.f32.gmra.mrb[0].mxu0 %v479
        %v574 = vpop.f32.mrb[0].mxu0
        %v575 = vadd.f32 0.0, %v574
        %v576 = vpop.f32.mrb[0].mxu0
        %577 = vmatprep.mubr.f32.mxu0 0.0
        %578 = vmatmul.mubr.f32.gmra.mrb[0].mxu0 %v482
        %v579 = vpop.f32.mrb[0].mxu0
        %v580 = vadd.f32 0.0, %v579
        %v581 = vpop.f32.mrb[0].mxu0
        %582 = vmatprep.mubr.f32.mxu0 0.0
        %583 = vmatmul.mubr.f32.gmra.mrb[0].mxu0 %v485
        %v584 = vpop.f32.mrb[0].mxu0
        %v585 = vadd.f32 0.0, %v584
        %v586 = vpop.f32.mrb[0].mxu0
        %587 = vmatprep.mubr.f32.mxu0 0.0
        %588 = vmatmul.mubr.f32.gmra.mrb[0].mxu0 %v488
        %v589 = vpop.f32.mrb[0].mxu0
        %v590 = vadd.f32 0.0, %v589
        %v591 = vpop.f32.mrb[0].mxu0
        %592 = vmatprep.mubr.f32.mxu0 0.0
        %593 = vmatmul.mubr.f32.gmra.mrb[0].mxu0 %v491
        %v594 = vpop.f32.mrb[0].mxu0
        %v595 = vadd.f32 0.0, %v594
        %v596 = vpop.f32.mrb[0].mxu0
        %597 = vdwg.mxu0
        %v599 = vsel %vm181, %v451, 0
        %v602 = vsel %vm181, %v452, 0
        %v605 = vsel %vm181, %v453, 0
        %v608 = vsel %vm181, %v454, 0
        %v611 = vsel %vm181, %v455, 0
        %v614 = vsel %vm181, %v456, 0
        %v617 = vsel %vm181, %v457, 0
        %v620 = vsel %vm181, %v458, 0
        %622 = vmatprep.subr.mxu0 0.0
        %623 = vmatpush1.msra.mxu0 %v151
        %624 = vmatprep.subr.mxu0 0.0
        %625 = vmatpush1.msra.mxu0 %v152
        %626 = vmatprep.subr.mxu0 0.0
        %627 = vmatpush1.msra.mxu0 0.0
        %628 = vmatprep.subr.mxu0 0.0
        %629 = vmatpush1.msra.mxu0 0.0
        %630 = vmatprep.subr.mxu0 0.0
        %631 = vmatpush1.msra.mxu0 0.0
        %632 = vmatprep.subr.mxu0 0.0
        %633 = vmatpush1.msra.mxu0 0.0
        %634 = vmatprep.subr.mxu0 0.0
        %635 = vmatpush1.msra.mxu0 0.0
        %636 = vmatprep.subr.mxu0 0.0
        %637 = vmatpush1.msra.mxu0 0.0
        %638 = vmatprep.subr.mxu0 0.0
        %639 = vmatpush1.msra.mxu0 0.0
        %640 = vmatprep.subr.mxu0 0.0
        %641 = vmatpush1.msra.mxu0 0.0
        %642 = vmatprep.subr.mxu0 0.0
        %643 = vmatpush1.msra.mxu0 0.0
        %644 = vmatprep.subr.mxu0 0.0
        %645 = vmatpush1.msra.mxu0 0.0
        %646 = vmatprep.subr.mxu0 0.0
        %647 = vmatpush1.msra.mxu0 0.0
        %648 = vmatprep.subr.mxu0 0.0
        %649 = vmatpush1.msra.mxu0 0.0
        %650 = vmatprep.subr.mxu0 0.0
        %651 = vmatpush1.msra.mxu0 0.0
        %652 = vmatprep.subr.mxu0 0.0
        %653 = vmatpush1.msra.mxu0 0.0
        %654 = vmatprep.subr.mxu0 0.0
        %655 = vmatpush1.msra.mxu0 0.0
        %656 = vmatprep.subr.mxu0 0.0
        %657 = vmatpush1.msra.mxu0 0.0
        %658 = vmatprep.subr.mxu0 0.0
        %659 = vmatpush1.msra.mxu0 0.0
        %660 = vmatprep.subr.mxu0 0.0
        %661 = vmatpush1.msra.mxu0 0.0
        %662 = vmatprep.subr.mxu0 0.0
        %663 = vmatpush1.msra.mxu0 0.0
        %664 = vmatprep.subr.mxu0 0.0
        %665 = vmatpush1.msra.mxu0 0.0
        %666 = vmatprep.subr.mxu0 0.0
        %667 = vmatpush1.msra.mxu0 0.0
        %668 = vmatprep.subr.mxu0 0.0
        %669 = vmatpush1.msra.mxu0 0.0
        %670 = vmatprep.subr.mxu0 0.0
        %671 = vmatpush1.msra.mxu0 0.0
        %672 = vmatprep.subr.mxu0 0.0
        %673 = vmatpush1.msra.mxu0 0.0
        %674 = vmatprep.subr.mxu0 0.0
        %675 = vmatpush1.msra.mxu0 0.0
        %676 = vmatprep.subr.mxu0 0.0
        %677 = vmatpush1.msra.mxu0 0.0
        %678 = vmatprep.subr.mxu0 0.0
        %679 = vmatpush1.msra.mxu0 0.0
        %680 = vmatprep.subr.mxu0 0.0
        %681 = vmatpush1.msra.mxu0 0.0
        %682 = vmatprep.subr.mxu0 0.0
        %683 = vmatpush1.msra.mxu0 0.0
        %684 = vmatprep.subr.mxu0 0.0
        %685 = vmatpush1.msra.mxu0 0.0
        %686 = vmatprep.mubr.f32.mxu0 0.0
        %687 = vmatmul.mubr.f32.gmra.mrb[0].mxu0 %v599
        %v688 = vpop.f32.mrb[0].mxu0
        %v689 = vadd.f32 %v560, %v688
        %v690 = vpop.f32.mrb[0].mxu0
        %691 = vmatprep.mubr.f32.mxu0 0.0
        %692 = vmatmul.mubr.f32.gmra.mrb[0].mxu0 %v602
        %v693 = vpop.f32.mrb[0].mxu0
        %v694 = vadd.f32 %v565, %v693
        %v695 = vpop.f32.mrb[0].mxu0
        %696 = vmatprep.mubr.f32.mxu0 0.0
        %697 = vmatmul.mubr.f32.gmra.mrb[0].mxu0 %v605
        %v698 = vpop.f32.mrb[0].mxu0
        %v699 = vadd.f32 %v570, %v698
        %v700 = vpop.f32.mrb[0].mxu0
        %701 = vmatprep.mubr.f32.mxu0 0.0
        %702 = vmatmul.mubr.f32.gmra.mrb[0].mxu0 %v608
        %v703 = vpop.f32.mrb[0].mxu0
        %v704 = vadd.f32 %v575, %v703
        %v705 = vpop.f32.mrb[0].mxu0
        %706 = vmatprep.mubr.f32.mxu0 0.0
        %707 = vmatmul.mubr.f32.gmra.mrb[0].mxu0 %v611
        %v708 = vpop.f32.mrb[0].mxu0
        %v709 = vadd.f32 %v580, %v708
        %v710 = vpop.f32.mrb[0].mxu0
        %711 = vmatprep.mubr.f32.mxu0 0.0
        %712 = vmatmul.mubr.f32.gmra.mrb[0].mxu0 %v614
        %v713 = vpop.f32.mrb[0].mxu0
        %v714 = vadd.f32 %v585, %v713
        %v715 = vpop.f32.mrb[0].mxu0
        %716 = vmatprep.mubr.f32.mxu0 0.0
        %717 = vmatmul.mubr.f32.gmra.mrb[0].mxu0 %v617
        %v718 = vpop.f32.mrb[0].mxu0
        %v719 = vadd.f32 %v590, %v718
        %v720 = vpop.f32.mrb[0].mxu0
        %721 = vmatprep.mubr.f32.mxu0 0.0
        %722 = vmatmul.mubr.f32.gmra.mrb[0].mxu0 %v620
        %v723 = vpop.f32.mrb[0].mxu0
        %v724 = vadd.f32 %v595, %v723
        %v725 = vpop.f32.mrb[0].mxu0
        %726 = vdwg.mxu0
        %735 = vrot.lane.b32.xlu0 %v689, 32
        %v736 = vpop.permute.xlu0 %735
        %737 = vrot.lane.b32.xlu0 %v694, 32
        %v738 = vpop.permute.xlu0 %737
        %739 = vrot.lane.b32.xlu0 %v699, 32
        %v740 = vpop.permute.xlu0 %739
        %741 = vrot.lane.b32.xlu0 %v704, 32
        %v742 = vpop.permute.xlu0 %741
        %743 = vrot.lane.b32.xlu0 %v709, 32
        %v744 = vpop.permute.xlu0 %743
        %745 = vrot.lane.b32.xlu0 %v714, 32
        %v746 = vpop.permute.xlu0 %745
        %747 = vrot.lane.b32.xlu0 %v719, 32
        %v748 = vpop.permute.xlu0 %747
        %749 = vrot.lane.b32.xlu0 %v724, 32
        %v750 = vpop.permute.xlu0 %749
        %vm759 = vcmask 523520
        %760 = vst.msk [vmem:[%s138] sm:$0xff] %vm759, %v736
        %761 = vst.msk [vmem:[%s138 + $0x8] sm:$0xff] %vm759, %v738
        %762 = vst.msk [vmem:[%s138 + $0x10] sm:$0xff] %vm759, %v740
        %763 = vst.msk [vmem:[%s138 + $0x18] sm:$0xff] %vm759, %v742
        %764 = vst.msk [vmem:[%s138 + $0x20] sm:$0xff] %vm759, %v744
        %765 = vst.msk [vmem:[%s138 + $0x28] sm:$0xff] %vm759, %v746
        %766 = vst.msk [vmem:[%s138 + $0x30] sm:$0xff] %vm759, %v748
        %767 = vst.msk [vmem:[%s138 + $0x38] sm:$0xff] %vm759, %v750
        %s768 = smul.u32 8, %s15
        %p769 = scmp.lt.s32.totalorder %s768, 15
        %s770 = scalar_select %p769, %s768, 15
        %s771 = smul.addr %s770, 8
        %s772 = scalar_lea.vmem %s1, %s771
        // Predicated region
        $region29: #{tpu_custom_call.1} parent=23 // pred_check
          %p773 = pneg %p59
        $region30: #{tpu_custom_call.1} parent=23 // pred_check_branch
          %775 = sbr.rel (%p773) target = $region32
        $region31: #{tpu_custom_call.1} parent=23 // pred_region
          %s776 = smul.u32 8, %s15
        $region32: #{tpu_custom_call.1} parent=23 // pred_fallthru
          _
      $region24: #{tpu_custom_call.1} parent=5 // pred_fallthru
        _
      %p777 = scmp.le.s32.totalorder 2, %s10
      // Predicated region
      $region33: #{tpu_custom_call.1} parent=5 // pred_check
        %p778 = pneg %p777
      $region34: #{tpu_custom_call.1} parent=5 // pred_check_branch
        %780 = sbr.rel (%p778) target = $region36
      $region35: #{tpu_custom_call.1} parent=5 // pred_region
        %s781 = ssub.s32 %s10, 2
        // Predicated region
        $region37: #{tpu_custom_call.1} parent=35 // pred_check
          %p782 = pneg %p65
        $region38: #{tpu_custom_call.1} parent=35 // pred_check_branch
          %784 = sbr.rel (%p782) target = $region40
        $region39: #{tpu_custom_call.1} parent=35 // pred_region
          %s785 = smul.u32 8, %s16
          %p786 = scmp.lt.s32.totalorder %s785, 15
          %s787 = scalar_select %p786, %s785, 15
          %s788 = smul.addr %s787, 8
          %s789 = scalar_lea.vmem %s1, %s788
        $region40: #{tpu_custom_call.1} parent=35 // pred_fallthru
          _
      $region36: #{tpu_custom_call.1} parent=5 // pred_fallthru
        _
    $region6: #{tpu_custom_call.1} parent=1 // loop_footer
      %s14 = sadd.s32 1, %s10
    $region7: #{tpu_custom_call.1} parent=1 // loop_footer_branch
      %9 = sbr.rel target = $region3
    $region8: #{tpu_custom_call.1} parent=1 // loop_exit
      _
    %790 = vsyncpa [#allocation3], 1
    %s791 = scalar_lea.sflag [#allocation3], 1
    %792 = vsyncpa %s791, 1

</llo_original>
